<compile_context>
chip_gen: v6e
topology: v6e:2x2x1
jax: 0.10.0
libtpu: 0.0.40
codegen_flags: <defaults>
</compile_context>

<pallas_src>
import jax
import jax.numpy as jnp
from jax.experimental import pallas as pl
from jax.experimental.pallas import tpu as pltpu

LANE = 128  # TPU lane width; feature dims are padded to multiples of this.


def _round_up(v, m):
    return (v + m - 1) // m * m


def _vmem_budget_bytes():
    """Generation-aware VMEM limit: ~75% of physical per-core VMEM, capped.

    v7x (64 MiB physical) -> 48 MiB; v5e / v6e (128 MiB) -> 96 MiB.
    Leaves headroom for Mosaic internal scratch and output double-buffers."""
    cap = 128 * 1024 * 1024
    try:
        cap = int(pltpu.get_tpu_info().vmem_capacity_bytes)
    except Exception:
        pass
    return min((cap * 3) // 4, 112 * 1024 * 1024)


def _resident_spec(block_shape):
    """Grid-invariant operand: constant index_map + single buffering.

    pl.Buffered(1) avoids double-buffering blocks that never change across the
    grid (A_hat / x / hw2 / weights), halving their VMEM footprint."""
    index_map = lambda *_: (0,) * len(block_shape)
    try:
        return pl.BlockSpec(block_shape, index_map, pipeline_mode=pl.Buffered(1))
    except TypeError:  # older JAX without pipeline_mode=
        return pl.BlockSpec(block_shape, index_map)


# ---------------------------------------------------------------------------
# Kernels
# ---------------------------------------------------------------------------
def _fused_kernel(a_ref, x_ref, w1_ref, b1_ref, w2_ref, b2_ref, wfc_ref,
                  bfc_ref, o_ref, hw2_ref):
    """Whole GCN forward in one pallas_call; A_hat read from HBM exactly once.

    grid = (2, num_row_tiles), iterated phase-major:
      phase 0: hw2[rows] = relu((A[rows] @ x) @ W1 + b1) @ W2   (VMEM scratch)
      phase 1: out[rows] = relu(A[rows] @ hw2 + b2 + x[rows] @ Wfc + bfc)
    """
    phase = pl.program_id(0)
    tm = o_ref.shape[0]
    r0 = pl.multiple_of(pl.program_id(1) * tm, tm)
    a_tile = a_ref[pl.ds(r0, tm), :]

    @pl.when(phase == 0)
    def _():
        # Aggregate first: the big (tm, Np) x (Np, Cp) contraction carries Cin.
        agg = jnp.dot(a_tile, x_ref[...], preferred_element_type=jnp.float32)
        h = jnp.dot(agg.astype(w1_ref.dtype), w1_ref[...],
                    preferred_element_type=jnp.float32) + b1_ref[...]
        h = jnp.maximum(h, 0.0)  # F.relu
        # TODO(synk): nn.Dropout(p=0.2) is identity in eval mode; training-mode
        # masking (pltpu.prng_seed / prng_random_bits) not implemented.
        hw2 = jnp.dot(h.astype(w2_ref.dtype), w2_ref[...],
                      preferred_element_type=jnp.float32)
        hw2_ref[pl.ds(r0, tm), :] = hw2.astype(hw2_ref.dtype)
        o_ref[...] = hw2.astype(o_ref.dtype)  # placeholder; overwritten in phase 1

    @pl.when(phase == 1)
    def _():
        o = jnp.dot(a_tile, hw2_ref[...],
                    preferred_element_type=jnp.float32) + b2_ref[...]
        res = jnp.dot(x_ref[pl.ds(r0, tm), :], wfc_ref[...],
                      preferred_element_type=jnp.float32) + bfc_ref[...]
        o_ref[...] = jnp.maximum(o + res, 0.0).astype(o_ref.dtype)


def _conv1_kernel(a_ref, x_ref, w1_ref, b1_ref, w2_ref, hw2_ref):
    """Two-stage fallback, stage 1: hw2 = relu((A_tile @ x) @ W1 + b1) @ W2."""
    agg = jnp.dot(a_ref[...], x_ref[...], preferred_element_type=jnp.float32)
    h = jnp.dot(agg.astype(w1_ref.dtype), w1_ref[...],
                preferred_element_type=jnp.float32) + b1_ref[...]
    h = jnp.maximum(h, 0.0)  # F.relu; dropout identity in eval mode
    hw2_ref[...] = jnp.dot(h.astype(w2_ref.dtype), w2_ref[...],
                           preferred_element_type=jnp.float32
                           ).astype(hw2_ref.dtype)


def _conv2_kernel(a_ref, hw2_ref, b2_ref, x_ref, wfc_ref, bfc_ref, o_ref):
    """Two-stage fallback, stage 2: relu(A_tile @ hw2 + b2 + x_tile @ Wfc + bfc)."""
    o = jnp.dot(a_ref[...], hw2_ref[...],
                preferred_element_type=jnp.float32) + b2_ref[...]
    res = jnp.dot(x_ref[...], wfc_ref[...],
                  preferred_element_type=jnp.float32) + bfc_ref[...]
    o_ref[...] = jnp.maximum(o + res, 0.0).astype(o_ref.dtype)


# ---------------------------------------------------------------------------
# Glue: normalized adjacency + padding / dtype prep (cacheable)
# ---------------------------------------------------------------------------
def build_normalized_adjacency(edge_index, num_nodes):
    """Dense D^{-1/2}(A+I)D^{-1/2} matching PyG gcn_norm (source->target flow).

    Existing self-loop edges are dropped and replaced by exactly one unit
    self-loop per node (add_remaining_self_loops semantics)."""
    src = edge_index[0]
    tgt = edge_index[1]
    w = jnp.where(src == tgt, 0.0, 1.0).astype(jnp.float32)
    a = jnp.zeros((num_nodes, num_nodes), jnp.float32).at[tgt, src].add(w)
    a = a + jnp.eye(num_nodes, dtype=jnp.float32)
    deg = a.sum(axis=1)
    dinv = jnp.where(deg > 0, jax.lax.rsqrt(deg), 0.0)
    return dinv[:, None] * a * dinv[None, :]


def _pick_row_tile(np_):
    # Bigger tiles amortize per-step overhead and lengthen DMAs (up to ~85% of
    # HBM roofline at 512); small graphs keep >= 2 row steps for v7x megacore.
    for cand in (512, 256, 128):
        if np_ % cand == 0 and np_ // cand >= 2:
            return cand
    return max(8, np_ // 2)


def prepare(x, edge_index, params, *, row_tile=None,
            compute_dtype=jnp.bfloat16):
    """Build A_hat and lane-dense padded / bf16-cast operands (cache me)."""
    n, cin = x.shape
    hid = params["w1"].shape[1]
    out = params["w2"].shape[1]

    np_ = _round_up(n, LANE)           # node dim -> multiple of 128
    if row_tile is None:
        row_tile = _pick_row_tile(np_)
    np_ = _round_up(np_, row_tile)     # and a multiple of the row tile
    cp = _round_up(cin, LANE)          # feature dims -> multiples of 128 lanes
    hp = _round_up(hid, LANE)
    op = _round_up(out, LANE)

    a_hat = build_normalized_adjacency(edge_index, n)

    def pad2(m, r, c):
        return jnp.pad(m, ((0, r - m.shape[0]), (0, c - m.shape[1])))

    ops = {
        # Zero padding keeps semantics: padded A_hat columns are zero, so
        # padded rows never contribute to real outputs; padded feature columns
        # carry zeros through every matmul/bias/relu and are sliced off.
        # TODO(synk): optional fp8 (v7x) / int8 (v5e/v6e) storage for A_hat.
        "a": pad2(a_hat, np_, np_).astype(compute_dtype),
        "x": pad2(x, np_, cp).astype(compute_dtype),
        "w1": pad2(params["w1"], cp, hp).astype(compute_dtype),
        "b1": jnp.pad(params["b1"], (0, hp - hid))[None, :].astype(jnp.float32),
        "w2": pad2(params["w2"], hp, op).astype(compute_dtype),
        "b2": jnp.pad(params["b2"], (0, op - out))[None, :].astype(jnp.float32),
        "wfc": pad2(params["wfc"], cp, op).astype(compute_dtype),
        "bfc": jnp.pad(params["bfc"], (0, op - out))[None, :].astype(jnp.float32),
    }
    meta = dict(n=n, out=out, np=np_, cp=cp, hp=hp, op=op, tm=row_tile,
                compute_dtype=compute_dtype)
    return ops, meta


# ---------------------------------------------------------------------------
# Forward
# ---------------------------------------------------------------------------
def gcn_forward_prepared(ops, meta):
    np_, cp, hp, op, tm = (meta["np"], meta["cp"], meta["hp"], meta["op"],
                           meta["tm"])
    cdtype = meta["compute_dtype"]
    itm = jnp.dtype(cdtype).itemsize
    budget = _vmem_budget_bytes()
    nrt = np_ // tm

    # VMEM footprint of the fused path (single-buffered residents + scratch).
    fused_bytes = ((np_ * np_ + np_ * cp + cp * hp + hp * op + cp * op) * itm
                   + (hp + 2 * op) * 4         # f32 biases
                   + np_ * op * itm            # hw2 scratch
                   + 2 * tm * op * itm)        # output double-buffer

    if fused_bytes + (4 << 20) <= budget:
        # ---- Fused path: A_hat read from HBM once, hw2 never leaves VMEM ----
        flops = (2 * np_ * np_ * (cp + op)
                 + 2 * np_ * (cp * hp + hp * op + cp * op))
        bytes_accessed = ((np_ * np_ + np_ * cp + cp * hp + hp * op + cp * op)
                          * itm + (hp + 2 * op) * 4 + np_ * op * itm)
        out_p = pl.pallas_call(
            _fused_kernel,
            out_shape=jax.ShapeDtypeStruct((np_, op), cdtype),
            grid=(2, nrt),                       # (phase, row tile), phase-major
            in_specs=[
                _resident_spec((np_, np_)),      # A_hat (resident, 1 buffer)
                _resident_spec((np_, cp)),       # x
                _resident_spec((cp, hp)),        # W1
                _resident_spec((1, hp)),         # b1
                _resident_spec((hp, op)),        # W2
                _resident_spec((1, op)),         # b2
                _resident_spec((cp, op)),        # Wfc
                _resident_spec((1, op)),         # bfc
            ],
            out_specs=pl.BlockSpec((tm, op), lambda p, i: (i, 0)),
            scratch_shapes=[pltpu.VMEM((np_, op), cdtype)],   # hw2 (all rows)
            compiler_params=pltpu.CompilerParams(
                dimension_semantics=("arbitrary", "arbitrary"),
                vmem_limit_bytes=budget),
            cost_estimate=pl.CostEstimate(flops=int(flops), transcendentals=0,
                                          bytes_accessed=int(bytes_accessed)),
        )(ops["a"], ops["x"], ops["w1"], ops["b1"], ops["w2"], ops["b2"],
          ops["wfc"], ops["bfc"])
        return out_p[: meta["n"], : meta["out"]].astype(jnp.float32)

    # ---- Two-stage fallback: A_hat row tiles streamed, rows parallel --------
    cparams = pltpu.CompilerParams(
        dimension_semantics=("parallel",),       # shards rows on v7x 2-TC
        vmem_limit_bytes=budget)

    ce1 = pl.CostEstimate(
        flops=int(2 * np_ * np_ * cp + 2 * np_ * (cp * hp + hp * op)),
        transcendentals=0,
        bytes_accessed=int((np_ * np_ + np_ * cp + cp * hp + hp * op + np_ * op)
                           * itm + hp * 4))
    hw2 = pl.pallas_call(
        _conv1_kernel,
        out_shape=jax.ShapeDtypeStruct((np_, op), cdtype),
        grid=(nrt,),
        in_specs=[
            pl.BlockSpec((tm, np_), lambda i: (i, 0)),   # A_hat row tile
            _resident_spec((np_, cp)),                   # full x (1 buffer)
            _resident_spec((cp, hp)),                    # W1
            _resident_spec((1, hp)),                     # b1
            _resident_spec((hp, op)),                    # W2
        ],
        out_specs=pl.BlockSpec((tm, op), lambda i: (i, 0)),
        compiler_params=cparams,
        cost_estimate=ce1,
    )(ops["a"], ops["x"], ops["w1"], ops["b1"], ops["w2"])

    ce2 = pl.CostEstimate(
        flops=int(2 * np_ * np_ * op + 2 * np_ * cp * op),
        transcendentals=0,
        bytes_accessed=int((np_ * np_ + 2 * np_ * op + np_ * cp + cp * op)
                           * itm + 2 * op * 4))
    out_p = pl.pallas_call(
        _conv2_kernel,
        out_shape=jax.ShapeDtypeStruct((np_, op), cdtype),
        grid=(nrt,),
        in_specs=[
            pl.BlockSpec((tm, np_), lambda i: (i, 0)),   # A_hat row tile
            _resident_spec((np_, op)),                   # full hw2 (1 buffer)
            _resident_spec((1, op)),                     # b2
            pl.BlockSpec((tm, cp), lambda i: (i, 0)),    # x row tile (residual)
            _resident_spec((cp, op)),                    # Wfc
            _resident_spec((1, op)),                     # bfc
        ],
        out_specs=pl.BlockSpec((tm, op), lambda i: (i, 0)),
        compiler_params=cparams,
        cost_estimate=ce2,
    )(ops["a"], hw2, ops["b2"], ops["x"], ops["wfc"], ops["bfc"])

    return out_p[: meta["n"], : meta["out"]].astype(jnp.float32)


def gcn_forward(x, edge_index, params, *, row_tile=None,
                compute_dtype=jnp.bfloat16):
    ops, meta = prepare(x, edge_index, params, row_tile=row_tile,
                        compute_dtype=compute_dtype)
    return gcn_forward_prepared(ops, meta)


# ---------------------------------------------------------------------------
# Parameter init (matches the module's layer shapes; weights stored (in, out))
# ---------------------------------------------------------------------------
def init_params(key, in_channel, hidden_channels, out_channel):
    k1, k2, k3 = jax.random.split(key, 3)
    s1 = 1.0 / jnp.sqrt(in_channel)
    s2 = 1.0 / jnp.sqrt(hidden_channels)
    return {
        "w1": jax.random.uniform(k1, (in_channel, hidden_channels),
                                 jnp.float32, -s1, s1),
        "b1": jnp.zeros((hidden_channels,), jnp.float32),
        "w2": jax.random.uniform(k2, (hidden_channels, out_channel),
                                 jnp.float32, -s2, s2),
        "b2": jnp.zeros((out_channel,), jnp.float32),
        "wfc": jax.random.uniform(k3, (in_channel, out_channel),
                                  jnp.float32, -s1, s1),
        "bfc": jnp.zeros((out_channel,), jnp.float32),
    }


if __name__ == "__main__":
    N = 16        # graph nodes
    IN_CH = 8
    HIDDEN = 32
    OUT_CH = 16
    E = 40        # directed edges

    key = jax.random.PRNGKey(0)
    kx, ke, kp = jax.random.split(key, 3)

    x = jax.random.normal(kx, (N, IN_CH), jnp.float32)
    edge_index = jax.random.randint(ke, (2, E), 0, N, dtype=jnp.int32)
    params = init_params(kp, IN_CH, HIDDEN, OUT_CH)

    fwd = jax.jit(gcn_forward)
    out = jax.block_until_ready(fwd(x, edge_index, params))
    assert out.shape == (N, OUT_CH)
    assert bool(jnp.all(jnp.isfinite(out)))

    # Pure-JAX reference (f32) — loose tolerance for the bf16 compute path.
    a_hat = build_normalized_adjacency(edge_index, N)
    h_ref = jnp.maximum(a_hat @ (x @ params["w1"]) + params["b1"], 0.0)
    o_ref = a_hat @ (h_ref @ params["w2"]) + params["b2"]
    ref = jnp.maximum(o_ref + x @ params["wfc"] + params["bfc"], 0.0)
    assert bool(jnp.allclose(out, ref, atol=1e-1, rtol=1e-1)), (
        float(jnp.max(jnp.abs(out - ref))))

    print("KERNEL_OK")
</pallas_src>

<mosaic_0001>
module attributes {stable_mosaic.version = 11 : i64} {
  func.func private @main(%arg0: i32) attributes {dimension_semantics = [#tpu.dimension_semantics<core_parallel>], iteration_bounds = array<i64: 2>, tpu.core_type = #tpu.core_type<sc_scalar_subcore>, window_params = []} {
    return
  }
}

module attributes {stable_mosaic.version = 11 : i64} {
  func.func private @main(%arg0: i32) attributes {dimension_semantics = [#tpu.dimension_semantics<core_parallel>], iteration_bounds = array<i64: 2>, tpu.core_type = #tpu.core_type<sc_scalar_subcore>, window_params = []} {
    return
  }
}

module attributes {stable_mosaic.version = 11 : i64} {
  func.func @_fused_kernel(%arg0: i32, %arg1: i32, %arg2: memref<128x128xbf16, #tpu.memory_space<vmem>>, %arg3: memref<128x128xbf16, #tpu.memory_space<vmem>>, %arg4: memref<128x128xbf16, #tpu.memory_space<vmem>>, %arg5: memref<1x128xf32, #tpu.memory_space<vmem>>, %arg6: memref<128x128xbf16, #tpu.memory_space<vmem>>, %arg7: memref<1x128xf32, #tpu.memory_space<vmem>>, %arg8: memref<128x128xbf16, #tpu.memory_space<vmem>>, %arg9: memref<1x128xf32, #tpu.memory_space<vmem>>, %arg10: memref<64x128xbf16, #tpu.memory_space<vmem>>, %arg11: memref<128x128xbf16, #tpu.memory_space<vmem>>) attributes {dimension_semantics = [#tpu.dimension_semantics<arbitrary>, #tpu.dimension_semantics<arbitrary>], iteration_bounds = array<i64: 2, 2>, scalar_prefetch = 0 : i64, scratch_operands = 1 : i64, tpu.core_type = #tpu.core_type<tc>, window_params = [{pipeline_mode = #tpu.pipeline_mode<synchronous>, transform_indices = @transform_0, window_bounds = array<i64: 128, 128>}, {pipeline_mode = #tpu.pipeline_mode<synchronous>, transform_indices = @transform_1, window_bounds = array<i64: 128, 128>}, {pipeline_mode = #tpu.pipeline_mode<synchronous>, transform_indices = @transform_2, window_bounds = array<i64: 128, 128>}, {pipeline_mode = #tpu.pipeline_mode<synchronous>, transform_indices = @transform_3, window_bounds = array<i64: 1, 128>}, {pipeline_mode = #tpu.pipeline_mode<synchronous>, transform_indices = @transform_4, window_bounds = array<i64: 128, 128>}, {pipeline_mode = #tpu.pipeline_mode<synchronous>, transform_indices = @transform_5, window_bounds = array<i64: 1, 128>}, {pipeline_mode = #tpu.pipeline_mode<synchronous>, transform_indices = @transform_6, window_bounds = array<i64: 128, 128>}, {pipeline_mode = #tpu.pipeline_mode<synchronous>, transform_indices = @transform_7, window_bounds = array<i64: 1, 128>}, {transform_indices = @transform_8, window_bounds = array<i64: 64, 128>}]} {
    %c64_i32 = arith.constant 64 : i32
    %0 = arith.muli %arg1, %c64_i32 : i32
    %1 = tpu.assume_multiple %0, 64 : i32
    %2 = arith.index_cast %1 : i32 to index
    %c0 = arith.constant 0 : index
    %3 = vector.load %arg2[%2, %c0] : memref<128x128xbf16, #tpu.memory_space<vmem>>, vector<64x128xbf16>
    %c0_i32 = arith.constant 0 : i32
    %4 = arith.cmpi eq, %arg0, %c0_i32 : i32
    %5 = arith.extui %4 : i1 to i32
    %c0_i32_0 = arith.constant 0 : i32
    %6 = arith.cmpi ne, %5, %c0_i32_0 : i32
    scf.if %6 {
      %c0_2 = arith.constant 0 : index
      %c0_3 = arith.constant 0 : index
      %10 = vector.load %arg3[%c0_2, %c0_3] : memref<128x128xbf16, #tpu.memory_space<vmem>>, vector<128x128xbf16>
      %cst = arith.constant dense<0.000000e+00> : vector<64x128xf32>
      %11 = tpu.matmul %3, %10, %cst {dimension_numbers = #tpu.dot_dimension_numbers<[1], [0], [0], [1], [0, 0, 1, 1], [], []>} : vector<64x128xbf16>, vector<128x128xbf16>, vector<64x128xf32> -> vector<64x128xf32>
      %12 = arith.truncf %11 : vector<64x128xf32> to vector<64x128xbf16>
      %c0_4 = arith.constant 0 : index
      %c0_5 = arith.constant 0 : index
      %13 = vector.load %arg4[%c0_4, %c0_5] : memref<128x128xbf16, #tpu.memory_space<vmem>>, vector<128x128xbf16>
      %cst_6 = arith.constant dense<0.000000e+00> : vector<64x128xf32>
      %14 = tpu.matmul %12, %13, %cst_6 {dimension_numbers = #tpu.dot_dimension_numbers<[1], [0], [0], [1], [0, 0, 1, 1], [], []>} : vector<64x128xbf16>, vector<128x128xbf16>, vector<64x128xf32> -> vector<64x128xf32>
      %c0_7 = arith.constant 0 : index
      %c0_8 = arith.constant 0 : index
      %15 = vector.load %arg5[%c0_7, %c0_8] : memref<1x128xf32, #tpu.memory_space<vmem>>, vector<1x128xf32>
      %16 = vector.broadcast %15 : vector<1x128xf32> to vector<64x128xf32>
      %17 = arith.addf %14, %16 : vector<64x128xf32>
      %cst_9 = arith.constant 0.000000e+00 : f32
      %18 = vector.broadcast %cst_9 : f32 to vector<64x128xf32>
      %19 = arith.maximumf %17, %18 : vector<64x128xf32>
      %20 = arith.truncf %19 : vector<64x128xf32> to vector<64x128xbf16>
      %c0_10 = arith.constant 0 : index
      %c0_11 = arith.constant 0 : index
      %21 = vector.load %arg6[%c0_10, %c0_11] : memref<128x128xbf16, #tpu.memory_space<vmem>>, vector<128x128xbf16>
      %cst_12 = arith.constant dense<0.000000e+00> : vector<64x128xf32>
      %22 = tpu.matmul %20, %21, %cst_12 {dimension_numbers = #tpu.dot_dimension_numbers<[1], [0], [0], [1], [0, 0, 1, 1], [], []>} : vector<64x128xbf16>, vector<128x128xbf16>, vector<64x128xf32> -> vector<64x128xf32>
      %23 = arith.truncf %22 : vector<64x128xf32> to vector<64x128xbf16>
      %24 = arith.index_cast %1 : i32 to index
      %c0_13 = arith.constant 0 : index
      %25 = vector.load %arg11[%24, %c0_13] : memref<128x128xbf16, #tpu.memory_space<vmem>>, vector<64x128xbf16>
      tpu.vector_store %arg11[%24, %c0_13], %23 {strides = array<i32>} : memref<128x128xbf16, #tpu.memory_space<vmem>>, vector<64x128xbf16>,
      %26 = arith.truncf %22 : vector<64x128xf32> to vector<64x128xbf16>
      %c0_14 = arith.constant 0 : index
      %c0_15 = arith.constant 0 : index
      %27 = vector.load %arg10[%c0_14, %c0_15] : memref<64x128xbf16, #tpu.memory_space<vmem>>, vector<64x128xbf16>
      tpu.vector_store %arg10[%c0_14, %c0_15], %26 {strides = array<i32>} : memref<64x128xbf16, #tpu.memory_space<vmem>>, vector<64x128xbf16>,
    } else {
    }
    %c1_i32 = arith.constant 1 : i32
    %7 = arith.cmpi eq, %arg0, %c1_i32 : i32
    %8 = arith.extui %7 : i1 to i32
    %c0_i32_1 = arith.constant 0 : i32
    %9 = arith.cmpi ne, %8, %c0_i32_1 : i32
    scf.if %9 {
      %c0_2 = arith.constant 0 : index
      %c0_3 = arith.constant 0 : index
      %10 = vector.load %arg11[%c0_2, %c0_3] : memref<128x128xbf16, #tpu.memory_space<vmem>>, vector<128x128xbf16>
      %cst = arith.constant dense<0.000000e+00> : vector<64x128xf32>
      %11 = tpu.matmul %3, %10, %cst {dimension_numbers = #tpu.dot_dimension_numbers<[1], [0], [0], [1], [0, 0, 1, 1], [], []>} : vector<64x128xbf16>, vector<128x128xbf16>, vector<64x128xf32> -> vector<64x128xf32>
      %c0_4 = arith.constant 0 : index
      %c0_5 = arith.constant 0 : index
      %12 = vector.load %arg7[%c0_4, %c0_5] : memref<1x128xf32, #tpu.memory_space<vmem>>, vector<1x128xf32>
      %13 = vector.broadcast %12 : vector<1x128xf32> to vector<64x128xf32>
      %14 = arith.addf %11, %13 : vector<64x128xf32>
      %15 = arith.index_cast %1 : i32 to index
      %c0_6 = arith.constant 0 : index
      %16 = vector.load %arg3[%15, %c0_6] : memref<128x128xbf16, #tpu.memory_space<vmem>>, vector<64x128xbf16>
      %c0_7 = arith.constant 0 : index
      %c0_8 = arith.constant 0 : index
      %17 = vector.load %arg8[%c0_7, %c0_8] : memref<128x128xbf16, #tpu.memory_space<vmem>>, vector<128x128xbf16>
      %cst_9 = arith.constant dense<0.000000e+00> : vector<64x128xf32>
      %18 = tpu.matmul %16, %17, %cst_9 {dimension_numbers = #tpu.dot_dimension_numbers<[1], [0], [0], [1], [0, 0, 1, 1], [], []>} : vector<64x128xbf16>, vector<128x128xbf16>, vector<64x128xf32> -> vector<64x128xf32>
      %c0_10 = arith.constant 0 : index
      %c0_11 = arith.constant 0 : index
      %19 = vector.load %arg9[%c0_10, %c0_11] : memref<1x128xf32, #tpu.memory_space<vmem>>, vector<1x128xf32>
      %20 = vector.broadcast %19 : vector<1x128xf32> to vector<64x128xf32>
      %21 = arith.addf %18, %20 : vector<64x128xf32>
      %22 = arith.addf %14, %21 : vector<64x128xf32>
      %cst_12 = arith.constant 0.000000e+00 : f32
      %23 = vector.broadcast %cst_12 : f32 to vector<64x128xf32>
      %24 = arith.maximumf %22, %23 : vector<64x128xf32>
      %25 = arith.truncf %24 : vector<64x128xf32> to vector<64x128xbf16>
      %c0_13 = arith.constant 0 : index
      %c0_14 = arith.constant 0 : index
      %26 = vector.load %arg10[%c0_13, %c0_14] : memref<64x128xbf16, #tpu.memory_space<vmem>>, vector<64x128xbf16>
      tpu.vector_store %arg10[%c0_13, %c0_14], %25 {strides = array<i32>} : memref<64x128xbf16, #tpu.memory_space<vmem>>, vector<64x128xbf16>,
    } else {
    }
    return
  }
  func.func @transform_0(%arg0: i32, %arg1: i32) -> (i32, i32) {
    %c0_i32 = arith.constant 0 : i32
    %c0_i32_0 = arith.constant 0 : i32
    %c0_i32_1 = arith.constant 0 : i32
    return %c0_i32, %c0_i32_0 : i32, i32
  }
  func.func @transform_1(%arg0: i32, %arg1: i32) -> (i32, i32) {
    %c0_i32 = arith.constant 0 : i32
    %c0_i32_0 = arith.constant 0 : i32
    %c0_i32_1 = arith.constant 0 : i32
    return %c0_i32, %c0_i32_0 : i32, i32
  }
  func.func @transform_2(%arg0: i32, %arg1: i32) -> (i32, i32) {
    %c0_i32 = arith.constant 0 : i32
    %c0_i32_0 = arith.constant 0 : i32
    %c0_i32_1 = arith.constant 0 : i32
    return %c0_i32, %c0_i32_0 : i32, i32
  }
  func.func @transform_3(%arg0: i32, %arg1: i32) -> (i32, i32) {
    %c0_i32 = arith.constant 0 : i32
    %c0_i32_0 = arith.constant 0 : i32
    %c0_i32_1 = arith.constant 0 : i32
    return %c0_i32, %c0_i32_0 : i32, i32
  }
  func.func @transform_4(%arg0: i32, %arg1: i32) -> (i32, i32) {
    %c0_i32 = arith.constant 0 : i32
    %c0_i32_0 = arith.constant 0 : i32
    %c0_i32_1 = arith.constant 0 : i32
    return %c0_i32, %c0_i32_0 : i32, i32
  }
  func.func @transform_5(%arg0: i32, %arg1: i32) -> (i32, i32) {
    %c0_i32 = arith.constant 0 : i32
    %c0_i32_0 = arith.constant 0 : i32
    %c0_i32_1 = arith.constant 0 : i32
    return %c0_i32, %c0_i32_0 : i32, i32
  }
  func.func @transform_6(%arg0: i32, %arg1: i32) -> (i32, i32) {
    %c0_i32 = arith.constant 0 : i32
    %c0_i32_0 = arith.constant 0 : i32
    %c0_i32_1 = arith.constant 0 : i32
    return %c0_i32, %c0_i32_0 : i32, i32
  }
  func.func @transform_7(%arg0: i32, %arg1: i32) -> (i32, i32) {
    %c0_i32 = arith.constant 0 : i32
    %c0_i32_0 = arith.constant 0 : i32
    %c0_i32_1 = arith.constant 0 : i32
    return %c0_i32, %c0_i32_0 : i32, i32
  }
  func.func @transform_8(%arg0: i32, %arg1: i32) -> (i32, i32) {
    %c0_i32 = arith.constant 0 : i32
    %c0_i32_0 = arith.constant 0 : i32
    return %arg1, %c0_i32 : i32, i32
  }
}

</mosaic_0001>

<llo_original>
// kernel: gcn_forward.1
$region0: #{gcn_forward.1}
  #allocation0 [shape = 'u32[]', space=smem, size = 0x4, offset = 0x4, fixed_abs, tag = 'smem constant byte address 0x4 - core index']
  #allocation1 [shape = 'u32[144,128]{1,0:T(1,128)}', space=vmem, size = 0x12000, scoped, tag = 'internal scratch']
  #allocation2 [shape = 'bf16[128,128]{1,0:T(8,128)(2,1)}', space=vmem, size = 0x8000, scoped, tag = 'scratch operand']
  %s0 = inlined_call_operand.vmem [shape: bf16[128,128], index: 0, kind: input, shape index: {}]
  %s1 = inlined_call_operand.vmem [shape: bf16[128,128], index: 1, kind: input, shape index: {}]
  %s2 = inlined_call_operand.vmem [shape: bf16[128,128], index: 2, kind: input, shape index: {}]
  %s3 = inlined_call_operand.vmem [shape: f32[1,128], index: 3, kind: input, shape index: {}]
  %s4 = inlined_call_operand.vmem [shape: bf16[128,128], index: 4, kind: input, shape index: {}]
  %s5 = inlined_call_operand.vmem [shape: f32[1,128], index: 5, kind: input, shape index: {}]
  %s6 = inlined_call_operand.vmem [shape: bf16[128,128], index: 6, kind: input, shape index: {}]
  %s7 = inlined_call_operand.vmem [shape: f32[1,128], index: 7, kind: input, shape index: {}]
  %s8 = inlined_call_operand.vmem [shape: bf16[128,128], index: 8, kind: output, shape index: {}]
  %s9 = sld [smem:[#allocation0]]
  $region73: #{gcn_forward.1} parent=0
    _
  %s11 = ssub.s32 1, %s9
  %s12 = scalar_select 0, %s11, %s9
  loop: start=0, step=1, limit=6
  $region2: #{gcn_forward.1} parent=0 // loop_pre_header
    _
  $region3: #{gcn_forward.1} parent=0 // loop_header
    %s14 = sphi 0, %s18
    %p15 = scmp.ge.s32.totalorder %s14, 6
    %s21 = sphi 0, %s33
    %s22 = sphi 0, %s29
    %s23 = sphi 0, %s21
    %s24 = sphi 0, %s22
    %s25 = sphi 0, %s23
    %s26 = sphi 0, %s24
    %s34 = sphi 0, %s34
    %s36 = sphi 0, %s34
    %s37 = sphi 0, %s36
    %s51 = sphi 0, %s37
    %s55 = sphi 0, %s55
    %s57 = sphi 0, %s55
    %s58 = sphi 0, %s57
    %s72 = sphi 0, %s58
    %s76 = sphi 0, %s76
    %s78 = sphi 0, %s76
    %s79 = sphi 0, %s78
    %s93 = sphi 0, %s79
    %s97 = sphi 0, %s97
    %s99 = sphi 0, %s97
    %s100 = sphi 0, %s99
    %s114 = sphi 0, %s100
    %s118 = sphi 0, %s118
    %s120 = sphi 0, %s118
    %s121 = sphi 0, %s120
    %s135 = sphi 0, %s121
    %s139 = sphi 0, %s139
    %s141 = sphi 0, %s139
    %s142 = sphi 0, %s141
    %s156 = sphi 0, %s142
    %s160 = sphi 0, %s160
    %s162 = sphi 0, %s160
    %s163 = sphi 0, %s162
    %s177 = sphi 0, %s163
    %s181 = sphi 0, %s181
    %s183 = sphi 0, %s181
    %s184 = sphi 0, %s183
    %s198 = sphi 0, %s184
    %s204 = sphi 0, %s206
    %s207 = sphi 0, %s204
    %s208 = sphi 0, %s207
    %s224 = sphi 0, %s208
  $region4: #{gcn_forward.1} parent=0 // loop_header_branch
    %17 = sbr.rel (%p15) target = $region8
  $region5: #{gcn_forward.1} parent=0 // loop_body
    %s19 = ssub.s32 %s14, 1
    %s20 = ssub.s32 %s14, 2
    %s27 = sadd.s32 1, %s22
    %p28 = scmp.ge.s32.totalorder %s27, 2
    %s29 = scalar_select %p28, 0, %s27
    %s30 = sadd.s32 1, %s21
    %s31 = scalar_select %p28, %s30, %s21
    %p32 = scmp.ge.s32.totalorder %s31, 2
    %s33 = scalar_select %p32, 0, %s31
    %s35 = sadd.s32 %s34, 1
    %p38 = scmp.eq.s32.totalorder %s14, 3
    %p39 = scmp.ne.s32.totalorder %s34, %s36
    %p40 = scmp.eq.s32.totalorder %s14, 0
    %p41 = por %p39, %p40
    %p42 = scmp.ne.s32.totalorder %s34, %s36
    %p43 = scmp.eq.s32.totalorder %s19, 3
    %p44 = por %p42, %p43
    %p45 = scmp.ne.s32.totalorder %s36, %s37
    %p46 = scmp.eq.s32.totalorder %s19, 0
    %p47 = por %p45, %p46
    %p48 = scmp.ne.s32.totalorder %s36, %s37
    %p49 = scmp.eq.s32.totalorder %s20, 3
    %p50 = por %p48, %p49
    %p52 = scmp.ne.s32.totalorder %s37, %s51
    %p53 = scmp.eq.s32.totalorder %s20, 0
    %p54 = por %p52, %p53
    %s56 = sadd.s32 %s55, 1
    %p59 = scmp.eq.s32.totalorder %s14, 3
    %p60 = scmp.ne.s32.totalorder %s55, %s57
    %p61 = scmp.eq.s32.totalorder %s14, 0
    %p62 = por %p60, %p61
    %p63 = scmp.ne.s32.totalorder %s55, %s57
    %p64 = scmp.eq.s32.totalorder %s19, 3
    %p65 = por %p63, %p64
    %p66 = scmp.ne.s32.totalorder %s57, %s58
    %p67 = scmp.eq.s32.totalorder %s19, 0
    %p68 = por %p66, %p67
    %p69 = scmp.ne.s32.totalorder %s57, %s58
    %p70 = scmp.eq.s32.totalorder %s20, 3
    %p71 = por %p69, %p70
    %p73 = scmp.ne.s32.totalorder %s58, %s72
    %p74 = scmp.eq.s32.totalorder %s20, 0
    %p75 = por %p73, %p74
    %s77 = sadd.s32 %s76, 1
    %p80 = scmp.eq.s32.totalorder %s14, 3
    %p81 = scmp.ne.s32.totalorder %s76, %s78
    %p82 = scmp.eq.s32.totalorder %s14, 0
    %p83 = por %p81, %p82
    %p84 = scmp.ne.s32.totalorder %s76, %s78
    %p85 = scmp.eq.s32.totalorder %s19, 3
    %p86 = por %p84, %p85
    %p87 = scmp.ne.s32.totalorder %s78, %s79
    %p88 = scmp.eq.s32.totalorder %s19, 0
    %p89 = por %p87, %p88
    %p90 = scmp.ne.s32.totalorder %s78, %s79
    %p91 = scmp.eq.s32.totalorder %s20, 3
    %p92 = por %p90, %p91
    %p94 = scmp.ne.s32.totalorder %s79, %s93
    %p95 = scmp.eq.s32.totalorder %s20, 0
    %p96 = por %p94, %p95
    %s98 = sadd.s32 %s97, 1
    %p101 = scmp.eq.s32.totalorder %s14, 3
    %p102 = scmp.ne.s32.totalorder %s97, %s99
    %p103 = scmp.eq.s32.totalorder %s14, 0
    %p104 = por %p102, %p103
    %p105 = scmp.ne.s32.totalorder %s97, %s99
    %p106 = scmp.eq.s32.totalorder %s19, 3
    %p107 = por %p105, %p106
    %p108 = scmp.ne.s32.totalorder %s99, %s100
    %p109 = scmp.eq.s32.totalorder %s19, 0
    %p110 = por %p108, %p109
    %p111 = scmp.ne.s32.totalorder %s99, %s100
    %p112 = scmp.eq.s32.totalorder %s20, 3
    %p113 = por %p111, %p112
    %p115 = scmp.ne.s32.totalorder %s100, %s114
    %p116 = scmp.eq.s32.totalorder %s20, 0
    %p117 = por %p115, %p116
    %s119 = sadd.s32 %s118, 1
    %p122 = scmp.eq.s32.totalorder %s14, 3
    %p123 = scmp.ne.s32.totalorder %s118, %s120
    %p124 = scmp.eq.s32.totalorder %s14, 0
    %p125 = por %p123, %p124
    %p126 = scmp.ne.s32.totalorder %s118, %s120
    %p127 = scmp.eq.s32.totalorder %s19, 3
    %p128 = por %p126, %p127
    %p129 = scmp.ne.s32.totalorder %s120, %s121
    %p130 = scmp.eq.s32.totalorder %s19, 0
    %p131 = por %p129, %p130
    %p132 = scmp.ne.s32.totalorder %s120, %s121
    %p133 = scmp.eq.s32.totalorder %s20, 3
    %p134 = por %p132, %p133
    %p136 = scmp.ne.s32.totalorder %s121, %s135
    %p137 = scmp.eq.s32.totalorder %s20, 0
    %p138 = por %p136, %p137
    %s140 = sadd.s32 %s139, 1
    %p143 = scmp.eq.s32.totalorder %s14, 3
    %p144 = scmp.ne.s32.totalorder %s139, %s141
    %p145 = scmp.eq.s32.totalorder %s14, 0
    %p146 = por %p144, %p145
    %p147 = scmp.ne.s32.totalorder %s139, %s141
    %p148 = scmp.eq.s32.totalorder %s19, 3
    %p149 = por %p147, %p148
    %p150 = scmp.ne.s32.totalorder %s141, %s142
    %p151 = scmp.eq.s32.totalorder %s19, 0
    %p152 = por %p150, %p151
    %p153 = scmp.ne.s32.totalorder %s141, %s142
    %p154 = scmp.eq.s32.totalorder %s20, 3
    %p155 = por %p153, %p154
    %p157 = scmp.ne.s32.totalorder %s142, %s156
    %p158 = scmp.eq.s32.totalorder %s20, 0
    %p159 = por %p157, %p158
    %s161 = sadd.s32 %s160, 1
    %p164 = scmp.eq.s32.totalorder %s14, 3
    %p165 = scmp.ne.s32.totalorder %s160, %s162
    %p166 = scmp.eq.s32.totalorder %s14, 0
    %p167 = por %p165, %p166
    %p168 = scmp.ne.s32.totalorder %s160, %s162
    %p169 = scmp.eq.s32.totalorder %s19, 3
    %p170 = por %p168, %p169
    %p171 = scmp.ne.s32.totalorder %s162, %s163
    %p172 = scmp.eq.s32.totalorder %s19, 0
    %p173 = por %p171, %p172
    %p174 = scmp.ne.s32.totalorder %s162, %s163
    %p175 = scmp.eq.s32.totalorder %s20, 3
    %p176 = por %p174, %p175
    %p178 = scmp.ne.s32.totalorder %s163, %s177
    %p179 = scmp.eq.s32.totalorder %s20, 0
    %p180 = por %p178, %p179
    %s182 = sadd.s32 %s181, 1
    %p185 = scmp.eq.s32.totalorder %s14, 3
    %p186 = scmp.ne.s32.totalorder %s181, %s183
    %p187 = scmp.eq.s32.totalorder %s14, 0
    %p188 = por %p186, %p187
    %p189 = scmp.ne.s32.totalorder %s181, %s183
    %p190 = scmp.eq.s32.totalorder %s19, 3
    %p191 = por %p189, %p190
    %p192 = scmp.ne.s32.totalorder %s183, %s184
    %p193 = scmp.eq.s32.totalorder %s19, 0
    %p194 = por %p192, %p193
    %p195 = scmp.ne.s32.totalorder %s183, %s184
    %p196 = scmp.eq.s32.totalorder %s20, 3
    %p197 = por %p195, %p196
    %p199 = scmp.ne.s32.totalorder %s184, %s198
    %p200 = scmp.eq.s32.totalorder %s20, 0
    %p201 = por %p199, %p200
    %s202 = ssub.s32 %s22, %s29
    %p203 = scmp.eq.s32.totalorder %s202, 0
    %s205 = sadd.s32 %s204, 1
    %s206 = scalar_select %p203, %s204, %s205
    %p209 = pneg %p203
    %p210 = scmp.eq.s32.totalorder %s14, 3
    %p211 = por %p209, %p210
    %p212 = scmp.ne.s32.totalorder %s204, %s207
    %p213 = scmp.eq.s32.totalorder %s14, 0
    %p214 = por %p212, %p213
    %p215 = scmp.ne.s32.totalorder %s204, %s207
    %p216 = scmp.eq.s32.totalorder %s19, 3
    %p217 = por %p215, %p216
    %p218 = scmp.ne.s32.totalorder %s207, %s208
    %p219 = scmp.eq.s32.totalorder %s19, 0
    %p220 = por %p218, %p219
    %p221 = scmp.ne.s32.totalorder %s207, %s208
    %p222 = scmp.eq.s32.totalorder %s20, 3
    %p223 = por %p221, %p222
    %p225 = scmp.ne.s32.totalorder %s208, %s224
    %p226 = scmp.eq.s32.totalorder %s20, 0
    %p227 = por %p225, %p226
    %p228 = scmp.le.s32.totalorder 1, %s14
    %p229 = scmp.lt.s32.totalorder %s14, 5
    %p230 = pnand %p228, %p229
    %p231 = pneg %p230
    // Predicated region
    $region9: #{gcn_forward.1} parent=5 // pred_check
      _
    $region10: #{gcn_forward.1} parent=5 // pred_check_branch
      %233 = sbr.rel (%p230) target = $region12
    $region11: #{gcn_forward.1} parent=5 // pred_region
      %s234 = ssub.s32 %s14, 1
      // Predicated region
      $region13: #{gcn_forward.1} parent=11 // pred_check
        %p235 = pneg %p47
      $region14: #{gcn_forward.1} parent=11 // pred_check_branch
        %237 = sbr.rel (%p235) target = $region16
      $region15: #{gcn_forward.1} parent=11 // pred_region
        _
      $region16: #{gcn_forward.1} parent=11 // pred_fallthru
        _
      // Predicated region
      $region17: #{gcn_forward.1} parent=11 // pred_check
        %p238 = pneg %p68
      $region18: #{gcn_forward.1} parent=11 // pred_check_branch
        %240 = sbr.rel (%p238) target = $region20
      $region19: #{gcn_forward.1} parent=11 // pred_region
        _
      $region20: #{gcn_forward.1} parent=11 // pred_fallthru
        _
      // Predicated region
      $region21: #{gcn_forward.1} parent=11 // pred_check
        %p241 = pneg %p89
      $region22: #{gcn_forward.1} parent=11 // pred_check_branch
        %243 = sbr.rel (%p241) target = $region24
      $region23: #{gcn_forward.1} parent=11 // pred_region
        _
      $region24: #{gcn_forward.1} parent=11 // pred_fallthru
        _
      // Predicated region
      $region25: #{gcn_forward.1} parent=11 // pred_check
        %p244 = pneg %p110
      $region26: #{gcn_forward.1} parent=11 // pred_check_branch
        %246 = sbr.rel (%p244) target = $region28
      $region27: #{gcn_forward.1} parent=11 // pred_region
        _
      $region28: #{gcn_forward.1} parent=11 // pred_fallthru
        _
      // Predicated region
      $region29: #{gcn_forward.1} parent=11 // pred_check
        %p247 = pneg %p131
      $region30: #{gcn_forward.1} parent=11 // pred_check_branch
        %249 = sbr.rel (%p247) target = $region32
      $region31: #{gcn_forward.1} parent=11 // pred_region
        _
      $region32: #{gcn_forward.1} parent=11 // pred_fallthru
        _
      // Predicated region
      $region33: #{gcn_forward.1} parent=11 // pred_check
        %p250 = pneg %p152
      $region34: #{gcn_forward.1} parent=11 // pred_check_branch
        %252 = sbr.rel (%p250) target = $region36
      $region35: #{gcn_forward.1} parent=11 // pred_region
        _
      $region36: #{gcn_forward.1} parent=11 // pred_fallthru
        _
      // Predicated region
      $region37: #{gcn_forward.1} parent=11 // pred_check
        %p253 = pneg %p173
      $region38: #{gcn_forward.1} parent=11 // pred_check_branch
        %255 = sbr.rel (%p253) target = $region40
      $region39: #{gcn_forward.1} parent=11 // pred_region
        _
      $region40: #{gcn_forward.1} parent=11 // pred_fallthru
        _
      // Predicated region
      $region41: #{gcn_forward.1} parent=11 // pred_check
        %p256 = pneg %p194
      $region42: #{gcn_forward.1} parent=11 // pred_check_branch
        %258 = sbr.rel (%p256) target = $region44
      $region43: #{gcn_forward.1} parent=11 // pred_region
        _
      $region44: #{gcn_forward.1} parent=11 // pred_fallthru
        _
    $region12: #{gcn_forward.1} parent=5 // pred_fallthru
      _
    %p259 = scmp.lt.s32.totalorder %s14, 4
    // Predicated region
    $region45: #{gcn_forward.1} parent=5 // pred_check
      %p260 = pneg %p259
    $region46: #{gcn_forward.1} parent=5 // pred_check_branch
      %262 = sbr.rel (%p260) target = $region48
    $region47: #{gcn_forward.1} parent=5 // pred_region
      _
    $region48: #{gcn_forward.1} parent=5 // pred_fallthru
      _
    %p263 = scmp.le.s32.totalorder 1, %s14
    %p264 = scmp.lt.s32.totalorder %s14, 5
    %p265 = pnand %p263, %p264
    %p266 = pneg %p265
    // Predicated region
    $region49: #{gcn_forward.1} parent=5 // pred_check
      _
    $region50: #{gcn_forward.1} parent=5 // pred_check_branch
      %268 = sbr.rel (%p265) target = $region52
    $region51: #{gcn_forward.1} parent=5 // pred_region
      %s269 = ssub.s32 %s14, 1
      %p270 = pneg %p47
      %p271 = pneg %p44
      %p272 = pneg %p68
      %p273 = pneg %p65
      %p274 = pneg %p89
      %p275 = pneg %p86
      %p276 = pneg %p110
      %p277 = pneg %p107
      %p278 = pneg %p131
      %p279 = pneg %p128
      %p280 = pneg %p152
      %p281 = pneg %p149
      %p282 = pneg %p173
      %p283 = pneg %p170
      %p284 = pneg %p194
      %p285 = pneg %p191
      %p286 = pneg %p220
      %p287 = pneg %p217
      %s288 = smul.u32 8, %s24
      %p289 = scmp.lt.s32.totalorder %s288, 15
      %s290 = scalar_select %p289, %s288, 15
      %s291 = smul.addr %s290, 4
      %s292 = scalar_lea.vmem %s8, %s291
      %s293 = smul.u32 8, %s24
      %p294 = scmp.lt.s32.totalorder %s293, 15
      %s295 = scalar_select %p294, %s293, 15
      %s296 = smul.addr %s295, 4
      %s297 = scalar_lea.vmem %s8, %s296
      %s298 = smul.u32 8, %s24
      %s300 = smul.u32 %s24, 64
      %s301 = sshra.s32 %s300, 3
      %s302 = sand.u32 %s300, 7
      %s303 = smul.addr %s301, 4
      %s304 = scalar_lea.vmem %s0, %s303
      %v305 = vld [vmem:[%s304] sm:$0xf]
      %v306 = vld [vmem:[%s304 + $0x4] sm:$0xf]
      %v307 = vld [vmem:[%s304 + $0x8] sm:$0xf]
      %v308 = vld [vmem:[%s304 + $0xc] sm:$0xf]
      %v309 = vld [vmem:[%s304 + $0x10] sm:$0xf]
      %v310 = vld [vmem:[%s304 + $0x14] sm:$0xf]
      %v311 = vld [vmem:[%s304 + $0x18] sm:$0xf]
      %v312 = vld [vmem:[%s304 + $0x1c] sm:$0xf]
      %p313 = scmp.eq.s32.totalorder %s23, 0
      // Predicated region
      $region53: #{gcn_forward.1} parent=51 // pred_check
        %p314 = pneg %p313
      $region54: #{gcn_forward.1} parent=51 // pred_check_branch
        %316 = sbr.rel (%p314) target = $region56
      $region55: #{gcn_forward.1} parent=51 // pred_region
        %v317 = vld [vmem:[%s1] sm:$0xf]
        %v318 = vld [vmem:[%s1 + $0x4] sm:$0xf]
        %v319 = vld [vmem:[%s1 + $0x8] sm:$0xf]
        %v320 = vld [vmem:[%s1 + $0xc] sm:$0xf]
        %v321 = vld [vmem:[%s1 + $0x10] sm:$0xf]
        %v322 = vld [vmem:[%s1 + $0x14] sm:$0xf]
        %v323 = vld [vmem:[%s1 + $0x18] sm:$0xf]
        %v324 = vld [vmem:[%s1 + $0x1c] sm:$0xf]
        %v325 = vld [vmem:[%s1 + $0x20] sm:$0xf]
        %v326 = vld [vmem:[%s1 + $0x24] sm:$0xf]
        %v327 = vld [vmem:[%s1 + $0x28] sm:$0xf]
        %v328 = vld [vmem:[%s1 + $0x2c] sm:$0xf]
        %v329 = vld [vmem:[%s1 + $0x30] sm:$0xf]
        %v330 = vld [vmem:[%s1 + $0x34] sm:$0xf]
        %v331 = vld [vmem:[%s1 + $0x38] sm:$0xf]
        %v332 = vld [vmem:[%s1 + $0x3c] sm:$0xf]
        %v341 = vunpack.c.l.b16 %v305
        %v342 = vunpack.c.l.b16 %v306
        %v343 = vunpack.c.l.b16 %v307
        %v344 = vunpack.c.l.b16 %v308
        %v345 = vunpack.c.l.b16 %v309
        %v346 = vunpack.c.l.b16 %v310
        %v347 = vunpack.c.l.b16 %v311
        %v348 = vunpack.c.l.b16 %v312
        %v349 = vpack.c.b16 %v342, %v341
        %v350 = vpack.c.b16 %v344, %v343
        %v351 = vpack.c.b16 %v346, %v345
        %v352 = vpack.c.b16 %v348, %v347
        %v373 = vunpack.c.l.b16 %v317
        %v374 = vunpack.c.l.b16 %v318
        %v375 = vunpack.c.l.b16 %v319
        %v376 = vunpack.c.l.b16 %v320
        %v377 = vunpack.c.l.b16 %v321
        %v378 = vunpack.c.l.b16 %v322
        %v379 = vunpack.c.l.b16 %v323
        %v380 = vunpack.c.l.b16 %v324
        %v381 = vunpack.c.l.b16 %v325
        %v382 = vunpack.c.l.b16 %v326
        %v383 = vunpack.c.l.b16 %v327
        %v384 = vunpack.c.l.b16 %v328
        %v385 = vunpack.c.l.b16 %v329
        %v386 = vunpack.c.l.b16 %v330
        %v387 = vunpack.c.l.b16 %v331
        %v388 = vunpack.c.l.b16 %v332
        %v389 = vpack.c.b16 %v374, %v373
        %v390 = vpack.c.b16 %v376, %v375
        %v391 = vpack.c.b16 %v378, %v377
        %v392 = vpack.c.b16 %v380, %v379
        %v393 = vpack.c.b16 %v382, %v381
        %v394 = vpack.c.b16 %v384, %v383
        %v395 = vpack.c.b16 %v386, %v385
        %v396 = vpack.c.b16 %v388, %v387
        %405 = vmatprep.subr.bf16.mxu0 0
        %406 = vmatpush1.bf16.msra.mxu0 %v396
        %407 = vmatprep.subr.bf16.mxu0 0
        %408 = vmatpush1.bf16.msra.mxu0 %v395
        %409 = vmatprep.subr.bf16.mxu0 0
        %410 = vmatpush1.bf16.msra.mxu0 %v394
        %411 = vmatprep.subr.bf16.mxu0 0
        %412 = vmatpush1.bf16.msra.mxu0 %v393
        %413 = vmatprep.subr.bf16.mxu0 0
        %414 = vmatpush1.bf16.msra.mxu0 %v392
        %415 = vmatprep.subr.bf16.mxu0 0
        %416 = vmatpush1.bf16.msra.mxu0 %v391
        %417 = vmatprep.subr.bf16.mxu0 0
        %418 = vmatpush1.bf16.msra.mxu0 %v390
        %419 = vmatprep.subr.bf16.mxu0 0
        %420 = vmatpush1.bf16.msra.mxu0 %v389
        %421 = vmatprep.subr.bf16.mxu0 0
        %422 = vmatpush2.bf16.msra.mxu0 0
        %423 = vmatprep.subr.bf16.mxu0 0
        %424 = vmatpush2.bf16.msra.mxu0 0
        %425 = vmatprep.subr.bf16.mxu0 0
        %426 = vmatpush2.bf16.msra.mxu0 0
        %427 = vmatprep.subr.bf16.mxu0 0
        %428 = vmatpush2.bf16.msra.mxu0 0
        %429 = vmatprep.subr.bf16.mxu0 0
        %430 = vmatpush2.bf16.msra.mxu0 0
        %431 = vmatprep.subr.bf16.mxu0 0
        %432 = vmatpush2.bf16.msra.mxu0 0
        %433 = vmatprep.subr.bf16.mxu0 0
        %434 = vmatpush2.bf16.msra.mxu0 0
        %435 = vmatprep.subr.bf16.mxu0 0
        %436 = vmatpush2.bf16.msra.mxu0 0
        %437 = vmatprep.mubr.bf16.mxu0 0
        %438 = vmatmul.mubr.bf16.gmra.mxu0 %v349
        %v439 = vpop.f32.mrf.mxu0
        %v440 = vadd.f32 0.0, %v439
        %v441 = vpop.f32.mrf.mxu0
        %v442 = vpop.f32.mrf.mxu0
        %v443 = vadd.f32 0.0, %v442
        %v444 = vpop.f32.mrf.mxu0
        %445 = vmatprep.mubr.bf16.mxu0 0
        %446 = vmatmul.mubr.bf16.gmra.mxu0 %v350
        %v447 = vpop.f32.mrf.mxu0
        %v448 = vadd.f32 0.0, %v447
        %v449 = vpop.f32.mrf.mxu0
        %v450 = vpop.f32.mrf.mxu0
        %v451 = vadd.f32 0.0, %v450
        %v452 = vpop.f32.mrf.mxu0
        %453 = vmatprep.mubr.bf16.mxu0 0
        %454 = vmatmul.mubr.bf16.gmra.mxu0 %v351
        %v455 = vpop.f32.mrf.mxu0
        %v456 = vadd.f32 0.0, %v455
        %v457 = vpop.f32.mrf.mxu0
        %v458 = vpop.f32.mrf.mxu0
        %v459 = vadd.f32 0.0, %v458
        %v460 = vpop.f32.mrf.mxu0
        %461 = vmatprep.mubr.bf16.mxu0 0
        %462 = vmatmul.mubr.bf16.gmra.mxu0 %v352
        %v463 = vpop.f32.mrf.mxu0
        %v464 = vadd.f32 0.0, %v463
        %v465 = vpop.f32.mrf.mxu0
        %v466 = vpop.f32.mrf.mxu0
        %v467 = vadd.f32 0.0, %v466
        %v468 = vpop.f32.mrf.mxu0
        %469 = vdwg.mxu0
        %v470 = vpack.c.bf16 %v443, %v440
        %v471 = vpack.c.bf16 %v451, %v448
        %v472 = vpack.c.bf16 %v459, %v456
        %v473 = vpack.c.bf16 %v467, %v464
        %v474 = vld [vmem:[%s2] sm:$0xf]
        %v475 = vld [vmem:[%s2 + $0x4] sm:$0xf]
        %v476 = vld [vmem:[%s2 + $0x8] sm:$0xf]
        %v477 = vld [vmem:[%s2 + $0xc] sm:$0xf]
        %v478 = vld [vmem:[%s2 + $0x10] sm:$0xf]
        %v479 = vld [vmem:[%s2 + $0x14] sm:$0xf]
        %v480 = vld [vmem:[%s2 + $0x18] sm:$0xf]
        %v481 = vld [vmem:[%s2 + $0x1c] sm:$0xf]
        %v482 = vld [vmem:[%s2 + $0x20] sm:$0xf]
        %v483 = vld [vmem:[%s2 + $0x24] sm:$0xf]
        %v484 = vld [vmem:[%s2 + $0x28] sm:$0xf]
        %v485 = vld [vmem:[%s2 + $0x2c] sm:$0xf]
        %v486 = vld [vmem:[%s2 + $0x30] sm:$0xf]
        %v487 = vld [vmem:[%s2 + $0x34] sm:$0xf]
        %v488 = vld [vmem:[%s2 + $0x38] sm:$0xf]
        %v489 = vld [vmem:[%s2 + $0x3c] sm:$0xf]
        %v490 = vld [vmem:[%s3] sm:$0x1]
        %v492 = vlaneseq
        %v493 = vshrl.u32 %v492, 7
        %v494 = vsub.s32 0, %v493
        %v495 = vrot.slane %v490, %v494
        %v513 = vunpack.c.l.b16 %v474
        %v514 = vunpack.c.l.b16 %v475
        %v515 = vunpack.c.l.b16 %v476
        %v516 = vunpack.c.l.b16 %v477
        %v517 = vunpack.c.l.b16 %v478
        %v518 = vunpack.c.l.b16 %v479
        %v519 = vunpack.c.l.b16 %v480
        %v520 = vunpack.c.l.b16 %v481
        %v521 = vunpack.c.l.b16 %v482
        %v522 = vunpack.c.l.b16 %v483
        %v523 = vunpack.c.l.b16 %v484
        %v524 = vunpack.c.l.b16 %v485
        %v525 = vunpack.c.l.b16 %v486
        %v526 = vunpack.c.l.b16 %v487
        %v527 = vunpack.c.l.b16 %v488
        %v528 = vunpack.c.l.b16 %v489
        %v529 = vpack.c.b16 %v514, %v513
        %v530 = vpack.c.b16 %v516, %v515
        %v531 = vpack.c.b16 %v518, %v517
        %v532 = vpack.c.b16 %v520, %v519
        %v533 = vpack.c.b16 %v522, %v521
        %v534 = vpack.c.b16 %v524, %v523
        %v535 = vpack.c.b16 %v526, %v525
        %v536 = vpack.c.b16 %v528, %v527
        %545 = vmatprep.subr.bf16.mxu0 0
        %546 = vmatpush1.bf16.msra.mxu0 %v536
        %547 = vmatprep.subr.bf16.mxu0 0
        %548 = vmatpush1.bf16.msra.mxu0 %v535
        %549 = vmatprep.subr.bf16.mxu0 0
        %550 = vmatpush1.bf16.msra.mxu0 %v534
        %551 = vmatprep.subr.bf16.mxu0 0
        %552 = vmatpush1.bf16.msra.mxu0 %v533
        %553 = vmatprep.subr.bf16.mxu0 0
        %554 = vmatpush1.bf16.msra.mxu0 %v532
        %555 = vmatprep.subr.bf16.mxu0 0
        %556 = vmatpush1.bf16.msra.mxu0 %v531
        %557 = vmatprep.subr.bf16.mxu0 0
        %558 = vmatpush1.bf16.msra.mxu0 %v530
        %559 = vmatprep.subr.bf16.mxu0 0
        %560 = vmatpush1.bf16.msra.mxu0 %v529
        %561 = vmatprep.subr.bf16.mxu0 0
        %562 = vmatpush2.bf16.msra.mxu0 0
        %563 = vmatprep.subr.bf16.mxu0 0
        %564 = vmatpush2.bf16.msra.mxu0 0
        %565 = vmatprep.subr.bf16.mxu0 0
        %566 = vmatpush2.bf16.msra.mxu0 0
        %567 = vmatprep.subr.bf16.mxu0 0
        %568 = vmatpush2.bf16.msra.mxu0 0
        %569 = vmatprep.subr.bf16.mxu0 0
        %570 = vmatpush2.bf16.msra.mxu0 0
        %571 = vmatprep.subr.bf16.mxu0 0
        %572 = vmatpush2.bf16.msra.mxu0 0
        %573 = vmatprep.subr.bf16.mxu0 0
        %574 = vmatpush2.bf16.msra.mxu0 0
        %575 = vmatprep.subr.bf16.mxu0 0
        %576 = vmatpush2.bf16.msra.mxu0 0
        %577 = vmatprep.mubr.bf16.mxu0 0
        %578 = vmatmul.mubr.bf16.gmra.mxu0 %v470
        %v579 = vpop.f32.mrf.mxu0
        %v580 = vadd.f32 %v495, %v579
        %v581 = vpop.f32.mrf.mxu0
        %v582 = vpop.f32.mrf.mxu0
        %v583 = vadd.f32 %v495, %v582
        %v584 = vpop.f32.mrf.mxu0
        %585 = vmatprep.mubr.bf16.mxu0 0
        %586 = vmatmul.mubr.bf16.gmra.mxu0 %v471
        %v587 = vpop.f32.mrf.mxu0
        %v588 = vadd.f32 %v495, %v587
        %v589 = vpop.f32.mrf.mxu0
        %v590 = vpop.f32.mrf.mxu0
        %v591 = vadd.f32 %v495, %v590
        %v592 = vpop.f32.mrf.mxu0
        %593 = vmatprep.mubr.bf16.mxu0 0
        %594 = vmatmul.mubr.bf16.gmra.mxu0 %v472
        %v595 = vpop.f32.mrf.mxu0
        %v596 = vadd.f32 %v495, %v595
        %v597 = vpop.f32.mrf.mxu0
        %v598 = vpop.f32.mrf.mxu0
        %v599 = vadd.f32 %v495, %v598
        %v600 = vpop.f32.mrf.mxu0
        %601 = vmatprep.mubr.bf16.mxu0 0
        %602 = vmatmul.mubr.bf16.gmra.mxu0 %v473
        %v603 = vpop.f32.mrf.mxu0
        %v604 = vadd.f32 %v495, %v603
        %v605 = vpop.f32.mrf.mxu0
        %v606 = vpop.f32.mrf.mxu0
        %v607 = vadd.f32 %v495, %v606
        %v608 = vpop.f32.mrf.mxu0
        %609 = vdwg.mxu0
        %v610 = vmax.f32 %v580, 0.0
        %v611 = vmax.f32 %v583, 0.0
        %v612 = vmax.f32 %v588, 0.0
        %v613 = vmax.f32 %v591, 0.0
        %v614 = vmax.f32 %v596, 0.0
        %v615 = vmax.f32 %v599, 0.0
        %v616 = vmax.f32 %v604, 0.0
        %v617 = vmax.f32 %v607, 0.0
        %v618 = vpack.c.bf16 %v611, %v610
        %v619 = vpack.c.bf16 %v613, %v612
        %v620 = vpack.c.bf16 %v615, %v614
        %v621 = vpack.c.bf16 %v617, %v616
        %v622 = vld [vmem:[%s4] sm:$0xf]
        %v623 = vld [vmem:[%s4 + $0x4] sm:$0xf]
        %v624 = vld [vmem:[%s4 + $0x8] sm:$0xf]
        %v625 = vld [vmem:[%s4 + $0xc] sm:$0xf]
        %v626 = vld [vmem:[%s4 + $0x10] sm:$0xf]
        %v627 = vld [vmem:[%s4 + $0x14] sm:$0xf]
        %v628 = vld [vmem:[%s4 + $0x18] sm:$0xf]
        %v629 = vld [vmem:[%s4 + $0x1c] sm:$0xf]
        %v630 = vld [vmem:[%s4 + $0x20] sm:$0xf]
        %v631 = vld [vmem:[%s4 + $0x24] sm:$0xf]
        %v632 = vld [vmem:[%s4 + $0x28] sm:$0xf]
        %v633 = vld [vmem:[%s4 + $0x2c] sm:$0xf]
        %v634 = vld [vmem:[%s4 + $0x30] sm:$0xf]
        %v635 = vld [vmem:[%s4 + $0x34] sm:$0xf]
        %v636 = vld [vmem:[%s4 + $0x38] sm:$0xf]
        %v637 = vld [vmem:[%s4 + $0x3c] sm:$0xf]
        %v654 = vunpack.c.l.b16 %v622
        %v655 = vunpack.c.l.b16 %v623
        %v656 = vunpack.c.l.b16 %v624
        %v657 = vunpack.c.l.b16 %v625
        %v658 = vunpack.c.l.b16 %v626
        %v659 = vunpack.c.l.b16 %v627
        %v660 = vunpack.c.l.b16 %v628
        %v661 = vunpack.c.l.b16 %v629
        %v662 = vunpack.c.l.b16 %v630
        %v663 = vunpack.c.l.b16 %v631
        %v664 = vunpack.c.l.b16 %v632
        %v665 = vunpack.c.l.b16 %v633
        %v666 = vunpack.c.l.b16 %v634
        %v667 = vunpack.c.l.b16 %v635
        %v668 = vunpack.c.l.b16 %v636
        %v669 = vunpack.c.l.b16 %v637
        %v670 = vpack.c.b16 %v655, %v654
        %v671 = vpack.c.b16 %v657, %v656
        %v672 = vpack.c.b16 %v659, %v658
        %v673 = vpack.c.b16 %v661, %v660
        %v674 = vpack.c.b16 %v663, %v662
        %v675 = vpack.c.b16 %v665, %v664
        %v676 = vpack.c.b16 %v667, %v666
        %v677 = vpack.c.b16 %v669, %v668
        %686 = vmatprep.subr.bf16.mxu0 0
        %687 = vmatpush1.bf16.msra.mxu0 %v677
        %688 = vmatprep.subr.bf16.mxu0 0
        %689 = vmatpush1.bf16.msra.mxu0 %v676
        %690 = vmatprep.subr.bf16.mxu0 0
        %691 = vmatpush1.bf16.msra.mxu0 %v675
        %692 = vmatprep.subr.bf16.mxu0 0
        %693 = vmatpush1.bf16.msra.mxu0 %v674
        %694 = vmatprep.subr.bf16.mxu0 0
        %695 = vmatpush1.bf16.msra.mxu0 %v673
        %696 = vmatprep.subr.bf16.mxu0 0
        %697 = vmatpush1.bf16.msra.mxu0 %v672
        %698 = vmatprep.subr.bf16.mxu0 0
        %699 = vmatpush1.bf16.msra.mxu0 %v671
        %700 = vmatprep.subr.bf16.mxu0 0
        %701 = vmatpush1.bf16.msra.mxu0 %v670
        %702 = vmatprep.subr.bf16.mxu0 0
        %703 = vmatpush2.bf16.msra.mxu0 0
        %704 = vmatprep.subr.bf16.mxu0 0
        %705 = vmatpush2.bf16.msra.mxu0 0
        %706 = vmatprep.subr.bf16.mxu0 0
        %707 = vmatpush2.bf16.msra.mxu0 0
        %708 = vmatprep.subr.bf16.mxu0 0
        %709 = vmatpush2.bf16.msra.mxu0 0
        %710 = vmatprep.subr.bf16.mxu0 0
        %711 = vmatpush2.bf16.msra.mxu0 0
        %712 = vmatprep.subr.bf16.mxu0 0
        %713 = vmatpush2.bf16.msra.mxu0 0
        %714 = vmatprep.subr.bf16.mxu0 0
        %715 = vmatpush2.bf16.msra.mxu0 0
        %716 = vmatprep.subr.bf16.mxu0 0
        %717 = vmatpush2.bf16.msra.mxu0 0
        %718 = vmatprep.mubr.bf16.mxu0 0
        %719 = vmatmul.mubr.bf16.gmra.mxu0 %v618
        %v720 = vpop.f32.mrf.mxu0
        %v721 = vadd.f32 0.0, %v720
        %v722 = vpop.f32.mrf.mxu0
        %v723 = vpop.f32.mrf.mxu0
        %v724 = vadd.f32 0.0, %v723
        %v725 = vpop.f32.mrf.mxu0
        %726 = vmatprep.mubr.bf16.mxu0 0
        %727 = vmatmul.mubr.bf16.gmra.mxu0 %v619
        %v728 = vpop.f32.mrf.mxu0
        %v729 = vadd.f32 0.0, %v728
        %v730 = vpop.f32.mrf.mxu0
        %v731 = vpop.f32.mrf.mxu0
        %v732 = vadd.f32 0.0, %v731
        %v733 = vpop.f32.mrf.mxu0
        %734 = vmatprep.mubr.bf16.mxu0 0
        %735 = vmatmul.mubr.bf16.gmra.mxu0 %v620
        %v736 = vpop.f32.mrf.mxu0
        %v737 = vadd.f32 0.0, %v736
        %v738 = vpop.f32.mrf.mxu0
        %v739 = vpop.f32.mrf.mxu0
        %v740 = vadd.f32 0.0, %v739
        %v741 = vpop.f32.mrf.mxu0
        %742 = vmatprep.mubr.bf16.mxu0 0
        %743 = vmatmul.mubr.bf16.gmra.mxu0 %v621
        %v744 = vpop.f32.mrf.mxu0
        %v745 = vadd.f32 0.0, %v744
        %v746 = vpop.f32.mrf.mxu0
        %v747 = vpop.f32.mrf.mxu0
        %v748 = vadd.f32 0.0, %v747
        %v749 = vpop.f32.mrf.mxu0
        %750 = vdwg.mxu0
        %v751 = vpack.c.bf16 %v724, %v721
        %v752 = vpack.c.bf16 %v732, %v729
        %v753 = vpack.c.bf16 %v740, %v737
        %v754 = vpack.c.bf16 %v748, %v745
        %v759 = vunpack.c.l.b16 %v751
        %v760 = vunpack.c.h.b16 %v751
        %v761 = vunpack.c.l.b16 %v752
        %v762 = vunpack.c.h.b16 %v752
        %v763 = vunpack.c.l.b16 %v753
        %v764 = vunpack.c.h.b16 %v753
        %v765 = vunpack.c.l.b16 %v754
        %v766 = vunpack.c.h.b16 %v754
        %v767 = vpack.c.b16 %v759, %v759
        %v768 = vpack.c.b16 %v760, %v760
        %v769 = vpack.c.b16 %v761, %v761
        %v770 = vpack.c.b16 %v762, %v762
        %v771 = vpack.c.b16 %v763, %v763
        %v772 = vpack.c.b16 %v764, %v764
        %v773 = vpack.c.b16 %v765, %v765
        %v774 = vpack.c.b16 %v766, %v766
        %s783 = smul.addr %s301, 4
        %s784 = scalar_lea.vmem [#allocation2], %s783
        %785 = vst [vmem:[%s784] sm:$0xf] %v767
        %786 = vst [vmem:[%s784 + $0x4] sm:$0xf] %v768
        %787 = vst [vmem:[%s784 + $0x8] sm:$0xf] %v769
        %788 = vst [vmem:[%s784 + $0xc] sm:$0xf] %v770
        %789 = vst [vmem:[%s784 + $0x10] sm:$0xf] %v771
        %790 = vst [vmem:[%s784 + $0x14] sm:$0xf] %v772
        %791 = vst [vmem:[%s784 + $0x18] sm:$0xf] %v773
        %792 = vst [vmem:[%s784 + $0x1c] sm:$0xf] %v774
        %793 = vst [vmem:[%s297] sm:$0xf] %v767
        %794 = vst [vmem:[%s297 + $0x4] sm:$0xf] %v768
        %795 = vst [vmem:[%s297 + $0x8] sm:$0xf] %v769
        %796 = vst [vmem:[%s297 + $0xc] sm:$0xf] %v770
        %797 = vst [vmem:[%s297 + $0x10] sm:$0xf] %v771
        %798 = vst [vmem:[%s297 + $0x14] sm:$0xf] %v772
        %799 = vst [vmem:[%s297 + $0x18] sm:$0xf] %v773
        %800 = vst [vmem:[%s297 + $0x1c] sm:$0xf] %v774
      $region56: #{gcn_forward.1} parent=51 // pred_fallthru
        _
      %p801 = scmp.eq.s32.totalorder %s23, 1
      // Predicated region
      $region57: #{gcn_forward.1} parent=51 // pred_check
        %p802 = pneg %p801
      $region58: #{gcn_forward.1} parent=51 // pred_check_branch
        %804 = sbr.rel (%p802) target = $region60
      $region59: #{gcn_forward.1} parent=51 // pred_region
        %v805 = vld [vmem:[#allocation2] sm:$0xf]
        %v806 = vld [vmem:[#allocation2 + $0x4] sm:$0xf]
        %v807 = vld [vmem:[#allocation2 + $0x8] sm:$0xf]
        %v808 = vld [vmem:[#allocation2 + $0xc] sm:$0xf]
        %v809 = vld [vmem:[#allocation2 + $0x10] sm:$0xf]
        %v810 = vld [vmem:[#allocation2 + $0x14] sm:$0xf]
        %v811 = vld [vmem:[#allocation2 + $0x18] sm:$0xf]
        %v812 = vld [vmem:[#allocation2 + $0x1c] sm:$0xf]
        %v813 = vld [vmem:[#allocation2 + $0x20] sm:$0xf]
        %v814 = vld [vmem:[#allocation2 + $0x24] sm:$0xf]
        %v815 = vld [vmem:[#allocation2 + $0x28] sm:$0xf]
        %v816 = vld [vmem:[#allocation2 + $0x2c] sm:$0xf]
        %v817 = vld [vmem:[#allocation2 + $0x30] sm:$0xf]
        %v818 = vld [vmem:[#allocation2 + $0x34] sm:$0xf]
        %v819 = vld [vmem:[#allocation2 + $0x38] sm:$0xf]
        %v820 = vld [vmem:[#allocation2 + $0x3c] sm:$0xf]
        %v821 = vld [vmem:[%s5] sm:$0x1]
        %v823 = vlaneseq
        %v824 = vshrl.u32 %v823, 7
        %v825 = vsub.s32 0, %v824
        %v826 = vrot.slane %v821, %v825
        %v836 = vunpack.c.l.b16 %v305
        %v837 = vunpack.c.l.b16 %v306
        %v838 = vunpack.c.l.b16 %v307
        %v839 = vunpack.c.l.b16 %v308
        %v840 = vunpack.c.l.b16 %v309
        %v841 = vunpack.c.l.b16 %v310
        %v842 = vunpack.c.l.b16 %v311
        %v843 = vunpack.c.l.b16 %v312
        %v844 = vpack.c.b16 %v837, %v836
        %v845 = vpack.c.b16 %v839, %v838
        %v846 = vpack.c.b16 %v841, %v840
        %v847 = vpack.c.b16 %v843, %v842
        %v868 = vunpack.c.l.b16 %v805
        %v869 = vunpack.c.l.b16 %v806
        %v870 = vunpack.c.l.b16 %v807
        %v871 = vunpack.c.l.b16 %v808
        %v872 = vunpack.c.l.b16 %v809
        %v873 = vunpack.c.l.b16 %v810
        %v874 = vunpack.c.l.b16 %v811
        %v875 = vunpack.c.l.b16 %v812
        %v876 = vunpack.c.l.b16 %v813
        %v877 = vunpack.c.l.b16 %v814
        %v878 = vunpack.c.l.b16 %v815
        %v879 = vunpack.c.l.b16 %v816
        %v880 = vunpack.c.l.b16 %v817
        %v881 = vunpack.c.l.b16 %v818
        %v882 = vunpack.c.l.b16 %v819
        %v883 = vunpack.c.l.b16 %v820
        %v884 = vpack.c.b16 %v869, %v868
        %v885 = vpack.c.b16 %v871, %v870
        %v886 = vpack.c.b16 %v873, %v872
        %v887 = vpack.c.b16 %v875, %v874
        %v888 = vpack.c.b16 %v877, %v876
        %v889 = vpack.c.b16 %v879, %v878
        %v890 = vpack.c.b16 %v881, %v880
        %v891 = vpack.c.b16 %v883, %v882
        %900 = vmatprep.subr.bf16.mxu0 0
        %901 = vmatpush1.bf16.msra.mxu0 %v891
        %902 = vmatprep.subr.bf16.mxu0 0
        %903 = vmatpush1.bf16.msra.mxu0 %v890
        %904 = vmatprep.subr.bf16.mxu0 0
        %905 = vmatpush1.bf16.msra.mxu0 %v889
        %906 = vmatprep.subr.bf16.mxu0 0
        %907 = vmatpush1.bf16.msra.mxu0 %v888
        %908 = vmatprep.subr.bf16.mxu0 0
        %909 = vmatpush1.bf16.msra.mxu0 %v887
        %910 = vmatprep.subr.bf16.mxu0 0
        %911 = vmatpush1.bf16.msra.mxu0 %v886
        %912 = vmatprep.subr.bf16.mxu0 0
        %913 = vmatpush1.bf16.msra.mxu0 %v885
        %914 = vmatprep.subr.bf16.mxu0 0
        %915 = vmatpush1.bf16.msra.mxu0 %v884
        %916 = vmatprep.subr.bf16.mxu0 0
        %917 = vmatpush2.bf16.msra.mxu0 0
        %918 = vmatprep.subr.bf16.mxu0 0
        %919 = vmatpush2.bf16.msra.mxu0 0
        %920 = vmatprep.subr.bf16.mxu0 0
        %921 = vmatpush2.bf16.msra.mxu0 0
        %922 = vmatprep.subr.bf16.mxu0 0
        %923 = vmatpush2.bf16.msra.mxu0 0
        %924 = vmatprep.subr.bf16.mxu0 0
        %925 = vmatpush2.bf16.msra.mxu0 0
        %926 = vmatprep.subr.bf16.mxu0 0
        %927 = vmatpush2.bf16.msra.mxu0 0
        %928 = vmatprep.subr.bf16.mxu0 0
        %929 = vmatpush2.bf16.msra.mxu0 0
        %930 = vmatprep.subr.bf16.mxu0 0
        %931 = vmatpush2.bf16.msra.mxu0 0
        %932 = vmatprep.mubr.bf16.mxu0 0
        %933 = vmatmul.mubr.bf16.gmra.mxu0 %v844
        %v934 = vpop.f32.mrf.mxu0
        %v935 = vadd.f32 %v826, %v934
        %v936 = vpop.f32.mrf.mxu0
        %v937 = vpop.f32.mrf.mxu0
        %v938 = vadd.f32 %v826, %v937
        %v939 = vpop.f32.mrf.mxu0
        %940 = vmatprep.mubr.bf16.mxu0 0
        %941 = vmatmul.mubr.bf16.gmra.mxu0 %v845
        %v942 = vpop.f32.mrf.mxu0
        %v943 = vadd.f32 %v826, %v942
        %v944 = vpop.f32.mrf.mxu0
        %v945 = vpop.f32.mrf.mxu0
        %v946 = vadd.f32 %v826, %v945
        %v947 = vpop.f32.mrf.mxu0
        %948 = vmatprep.mubr.bf16.mxu0 0
        %949 = vmatmul.mubr.bf16.gmra.mxu0 %v846
        %v950 = vpop.f32.mrf.mxu0
        %v951 = vadd.f32 %v826, %v950
        %v952 = vpop.f32.mrf.mxu0
        %v953 = vpop.f32.mrf.mxu0
        %v954 = vadd.f32 %v826, %v953
        %v955 = vpop.f32.mrf.mxu0
        %956 = vmatprep.mubr.bf16.mxu0 0
        %957 = vmatmul.mubr.bf16.gmra.mxu0 %v847
        %v958 = vpop.f32.mrf.mxu0
        %v959 = vadd.f32 %v826, %v958
        %v960 = vpop.f32.mrf.mxu0
        %v961 = vpop.f32.mrf.mxu0
        %v962 = vadd.f32 %v826, %v961
        %v963 = vpop.f32.mrf.mxu0
        %964 = vdwg.mxu0
        %s965 = smul.addr %s301, 4
        %s966 = scalar_lea.vmem %s1, %s965
        %v967 = vld [vmem:[%s966] sm:$0xf]
        %v968 = vld [vmem:[%s966 + $0x4] sm:$0xf]
        %v969 = vld [vmem:[%s966 + $0x8] sm:$0xf]
        %v970 = vld [vmem:[%s966 + $0xc] sm:$0xf]
        %v971 = vld [vmem:[%s966 + $0x10] sm:$0xf]
        %v972 = vld [vmem:[%s966 + $0x14] sm:$0xf]
        %v973 = vld [vmem:[%s966 + $0x18] sm:$0xf]
        %v974 = vld [vmem:[%s966 + $0x1c] sm:$0xf]
        %v975 = vld [vmem:[%s6] sm:$0xf]
        %v976 = vld [vmem:[%s6 + $0x4] sm:$0xf]
        %v977 = vld [vmem:[%s6 + $0x8] sm:$0xf]
        %v978 = vld [vmem:[%s6 + $0xc] sm:$0xf]
        %v979 = vld [vmem:[%s6 + $0x10] sm:$0xf]
        %v980 = vld [vmem:[%s6 + $0x14] sm:$0xf]
        %v981 = vld [vmem:[%s6 + $0x18] sm:$0xf]
        %v982 = vld [vmem:[%s6 + $0x1c] sm:$0xf]
        %v983 = vld [vmem:[%s6 + $0x20] sm:$0xf]
        %v984 = vld [vmem:[%s6 + $0x24] sm:$0xf]
        %v985 = vld [vmem:[%s6 + $0x28] sm:$0xf]
        %v986 = vld [vmem:[%s6 + $0x2c] sm:$0xf]
        %v987 = vld [vmem:[%s6 + $0x30] sm:$0xf]
        %v988 = vld [vmem:[%s6 + $0x34] sm:$0xf]
        %v989 = vld [vmem:[%s6 + $0x38] sm:$0xf]
        %v990 = vld [vmem:[%s6 + $0x3c] sm:$0xf]
        %v991 = vld [vmem:[%s7] sm:$0x1]
        %v993 = vlaneseq
        %v994 = vshrl.u32 %v993, 7
        %v995 = vsub.s32 0, %v994
        %v996 = vrot.slane %v991, %v995
        %v1006 = vunpack.c.l.b16 %v967
        %v1007 = vunpack.c.l.b16 %v968
        %v1008 = vunpack.c.l.b16 %v969
        %v1009 = vunpack.c.l.b16 %v970
        %v1010 = vunpack.c.l.b16 %v971
        %v1011 = vunpack.c.l.b16 %v972
        %v1012 = vunpack.c.l.b16 %v973
        %v1013 = vunpack.c.l.b16 %v974
        %v1014 = vpack.c.b16 %v1007, %v1006
        %v1015 = vpack.c.b16 %v1009, %v1008
        %v1016 = vpack.c.b16 %v1011, %v1010
        %v1017 = vpack.c.b16 %v1013, %v1012
        %v1038 = vunpack.c.l.b16 %v975
        %v1039 = vunpack.c.l.b16 %v976
        %v1040 = vunpack.c.l.b16 %v977
        %v1041 = vunpack.c.l.b16 %v978
        %v1042 = vunpack.c.l.b16 %v979
        %v1043 = vunpack.c.l.b16 %v980
        %v1044 = vunpack.c.l.b16 %v981
        %v1045 = vunpack.c.l.b16 %v982
        %v1046 = vunpack.c.l.b16 %v983
        %v1047 = vunpack.c.l.b16 %v984
        %v1048 = vunpack.c.l.b16 %v985
        %v1049 = vunpack.c.l.b16 %v986
        %v1050 = vunpack.c.l.b16 %v987
        %v1051 = vunpack.c.l.b16 %v988
        %v1052 = vunpack.c.l.b16 %v989
        %v1053 = vunpack.c.l.b16 %v990
        %v1054 = vpack.c.b16 %v1039, %v1038
        %v1055 = vpack.c.b16 %v1041, %v1040
        %v1056 = vpack.c.b16 %v1043, %v1042
        %v1057 = vpack.c.b16 %v1045, %v1044
        %v1058 = vpack.c.b16 %v1047, %v1046
        %v1059 = vpack.c.b16 %v1049, %v1048
        %v1060 = vpack.c.b16 %v1051, %v1050
        %v1061 = vpack.c.b16 %v1053, %v1052
        %1070 = vmatprep.subr.bf16.mxu0 0
        %1071 = vmatpush1.bf16.msra.mxu0 %v1061
        %1072 = vmatprep.subr.bf16.mxu0 0
        %1073 = vmatpush1.bf16.msra.mxu0 %v1060
        %1074 = vmatprep.subr.bf16.mxu0 0
        %1075 = vmatpush1.bf16.msra.mxu0 %v1059
        %1076 = vmatprep.subr.bf16.mxu0 0
        %1077 = vmatpush1.bf16.msra.mxu0 %v1058
        %1078 = vmatprep.subr.bf16.mxu0 0
        %1079 = vmatpush1.bf16.msra.mxu0 %v1057
        %1080 = vmatprep.subr.bf16.mxu0 0
        %1081 = vmatpush1.bf16.msra.mxu0 %v1056
        %1082 = vmatprep.subr.bf16.mxu0 0
        %1083 = vmatpush1.bf16.msra.mxu0 %v1055
        %1084 = vmatprep.subr.bf16.mxu0 0
        %1085 = vmatpush1.bf16.msra.mxu0 %v1054
        %1086 = vmatprep.subr.bf16.mxu0 0
        %1087 = vmatpush2.bf16.msra.mxu0 0
        %1088 = vmatprep.subr.bf16.mxu0 0
        %1089 = vmatpush2.bf16.msra.mxu0 0
        %1090 = vmatprep.subr.bf16.mxu0 0
        %1091 = vmatpush2.bf16.msra.mxu0 0
        %1092 = vmatprep.subr.bf16.mxu0 0
        %1093 = vmatpush2.bf16.msra.mxu0 0
        %1094 = vmatprep.subr.bf16.mxu0 0
        %1095 = vmatpush2.bf16.msra.mxu0 0
        %1096 = vmatprep.subr.bf16.mxu0 0
        %1097 = vmatpush2.bf16.msra.mxu0 0
        %1098 = vmatprep.subr.bf16.mxu0 0
        %1099 = vmatpush2.bf16.msra.mxu0 0
        %1100 = vmatprep.subr.bf16.mxu0 0
        %1101 = vmatpush2.bf16.msra.mxu0 0
        %1102 = vmatprep.mubr.bf16.mxu0 0
        %1103 = vmatmul.mubr.bf16.gmra.mxu0 %v1014
        %v1104 = vpop.f32.mrf.mxu0
        %v1105 = vadd.f32 %v996, %v1104
        %v1106 = vpop.f32.mrf.mxu0
        %v1107 = vpop.f32.mrf.mxu0
        %v1108 = vadd.f32 %v996, %v1107
        %v1109 = vpop.f32.mrf.mxu0
        %1110 = vmatprep.mubr.bf16.mxu0 0
        %1111 = vmatmul.mubr.bf16.gmra.mxu0 %v1015
        %v1112 = vpop.f32.mrf.mxu0
        %v1113 = vadd.f32 %v996, %v1112
        %v1114 = vpop.f32.mrf.mxu0
        %v1115 = vpop.f32.mrf.mxu0
        %v1116 = vadd.f32 %v996, %v1115
        %v1117 = vpop.f32.mrf.mxu0
        %1118 = vmatprep.mubr.bf16.mxu0 0
        %1119 = vmatmul.mubr.bf16.gmra.mxu0 %v1016
        %v1120 = vpop.f32.mrf.mxu0
        %v1121 = vadd.f32 %v996, %v1120
        %v1122 = vpop.f32.mrf.mxu0
        %v1123 = vpop.f32.mrf.mxu0
        %v1124 = vadd.f32 %v996, %v1123
        %v1125 = vpop.f32.mrf.mxu0
        %1126 = vmatprep.mubr.bf16.mxu0 0
        %1127 = vmatmul.mubr.bf16.gmra.mxu0 %v1017
        %v1128 = vpop.f32.mrf.mxu0
        %v1129 = vadd.f32 %v996, %v1128
        %v1130 = vpop.f32.mrf.mxu0
        %v1131 = vpop.f32.mrf.mxu0
        %v1132 = vadd.f32 %v996, %v1131
        %v1133 = vpop.f32.mrf.mxu0
        %1134 = vdwg.mxu0
        %v1135 = vadd.f32 %v935, %v1105
        %v1136 = vadd.f32 %v938, %v1108
        %v1137 = vadd.f32 %v943, %v1113
        %v1138 = vadd.f32 %v946, %v1116
        %v1139 = vadd.f32 %v951, %v1121
        %v1140 = vadd.f32 %v954, %v1124
        %v1141 = vadd.f32 %v959, %v1129
        %v1142 = vadd.f32 %v962, %v1132
        %v1143 = vmax.f32 %v1135, 0.0
        %v1144 = vmax.f32 %v1136, 0.0
        %v1145 = vmax.f32 %v1137, 0.0
        %v1146 = vmax.f32 %v1138, 0.0
        %v1147 = vmax.f32 %v1139, 0.0
        %v1148 = vmax.f32 %v1140, 0.0
        %v1149 = vmax.f32 %v1141, 0.0
        %v1150 = vmax.f32 %v1142, 0.0
        %v1151 = vpack.c.bf16 %v1144, %v1143
        %v1152 = vpack.c.bf16 %v1146, %v1145
        %v1153 = vpack.c.bf16 %v1148, %v1147
        %v1154 = vpack.c.bf16 %v1150, %v1149
        %v1159 = vunpack.c.l.b16 %v1151
        %v1160 = vunpack.c.h.b16 %v1151
        %v1161 = vunpack.c.l.b16 %v1152
        %v1162 = vunpack.c.h.b16 %v1152
        %v1163 = vunpack.c.l.b16 %v1153
        %v1164 = vunpack.c.h.b16 %v1153
        %v1165 = vunpack.c.l.b16 %v1154
        %v1166 = vunpack.c.h.b16 %v1154
        %v1167 = vpack.c.b16 %v1159, %v1159
        %v1168 = vpack.c.b16 %v1160, %v1160
        %v1169 = vpack.c.b16 %v1161, %v1161
        %v1170 = vpack.c.b16 %v1162, %v1162
        %v1171 = vpack.c.b16 %v1163, %v1163
        %v1172 = vpack.c.b16 %v1164, %v1164
        %v1173 = vpack.c.b16 %v1165, %v1165
        %v1174 = vpack.c.b16 %v1166, %v1166
        %1183 = vst [vmem:[%s297] sm:$0xf] %v1167
        %1184 = vst [vmem:[%s297 + $0x4] sm:$0xf] %v1168
        %1185 = vst [vmem:[%s297 + $0x8] sm:$0xf] %v1169
        %1186 = vst [vmem:[%s297 + $0xc] sm:$0xf] %v1170
        %1187 = vst [vmem:[%s297 + $0x10] sm:$0xf] %v1171
        %1188 = vst [vmem:[%s297 + $0x14] sm:$0xf] %v1172
        %1189 = vst [vmem:[%s297 + $0x18] sm:$0xf] %v1173
        %1190 = vst [vmem:[%s297 + $0x1c] sm:$0xf] %v1174
      $region60: #{gcn_forward.1} parent=51 // pred_fallthru
        _
      %s1191 = smul.u32 8, %s24
      %p1192 = scmp.lt.s32.totalorder %s1191, 15
      %s1193 = scalar_select %p1192, %s1191, 15
      %s1194 = smul.addr %s1193, 4
      %s1195 = scalar_lea.vmem %s8, %s1194
      // Predicated region
      $region61: #{gcn_forward.1} parent=51 // pred_check
        %p1196 = pneg %p217
      $region62: #{gcn_forward.1} parent=51 // pred_check_branch
        %1198 = sbr.rel (%p1196) target = $region64
      $region63: #{gcn_forward.1} parent=51 // pred_region
        %s1199 = smul.u32 8, %s24
      $region64: #{gcn_forward.1} parent=51 // pred_fallthru
        _
    $region52: #{gcn_forward.1} parent=5 // pred_fallthru
      _
    %p1200 = scmp.le.s32.totalorder 2, %s14
    // Predicated region
    $region65: #{gcn_forward.1} parent=5 // pred_check
      %p1201 = pneg %p1200
    $region66: #{gcn_forward.1} parent=5 // pred_check_branch
      %1203 = sbr.rel (%p1201) target = $region68
    $region67: #{gcn_forward.1} parent=5 // pred_region
      %s1204 = ssub.s32 %s14, 2
      // Predicated region
      $region69: #{gcn_forward.1} parent=67 // pred_check
        %p1205 = pneg %p223
      $region70: #{gcn_forward.1} parent=67 // pred_check_branch
        %1207 = sbr.rel (%p1205) target = $region72
      $region71: #{gcn_forward.1} parent=67 // pred_region
        %s1208 = smul.u32 8, %s26
        %p1209 = scmp.lt.s32.totalorder %s1208, 15
        %s1210 = scalar_select %p1209, %s1208, 15
        %s1211 = smul.addr %s1210, 4
        %s1212 = scalar_lea.vmem %s8, %s1211
      $region72: #{gcn_forward.1} parent=67 // pred_fallthru
        _
    $region68: #{gcn_forward.1} parent=5 // pred_fallthru
      _
  $region6: #{gcn_forward.1} parent=0 // loop_footer
    %s18 = sadd.s32 1, %s14
  $region7: #{gcn_forward.1} parent=0 // loop_footer_branch
    %13 = sbr.rel target = $region3
  $region8: #{gcn_forward.1} parent=0 // loop_exit
    _

</llo_original>
